<compile_context>
chip_gen: v6e
topology: v6e:2x2x1
jax: 0.10.0
libtpu: 0.0.40
codegen_flags: <defaults>
</compile_context>

<pallas_src>
import functools

import jax
import jax.numpy as jnp
from jax.experimental import pallas as pl
from jax.experimental.pallas import tpu as pltpu

# PyTorch nn.SELU constants
_SELU_ALPHA = 1.6732632423543772
_SELU_SCALE = 1.0507009873554805

SUBLANE = 8  # f32 sublane width (second-to-last dim granularity)


def _round_up(n, m):
    return (n + m - 1) // m * m


def _selu(x):
    # scale * (x if x > 0 else alpha * (exp(x) - 1)); exp argument clamped so
    # the discarded branch stays finite (autodiff / mask-rewrite safe).
    return _SELU_SCALE * jnp.where(
        x > 0.0, x, _SELU_ALPHA * (jnp.exp(jnp.minimum(x, 0.0)) - 1.0)
    )


def _softplus(x):
    # Numerically stable softplus; matches nn.Softplus(beta=1, threshold=20)
    # to within float rounding (log1p term < 2e-9 beyond the threshold).
    return jnp.maximum(x, 0.0) + jnp.log1p(jnp.exp(-jnp.abs(x)))


def ff_kernel(x_ref, w1_ref, b1_ref, w2_ref, b2_ref, w3_ref, b3_ref, o_ref):
    """Fused MLP forward: (Linear+SELU) x2 -> Linear -> Softplus.

    Weights are VMEM-resident; matmuls run on the MXU with f32 accumulation,
    bias add and activations run in f32 on the VPU/EUP.
    """
    cdt = w1_ref.dtype
    x = x_ref[...].astype(cdt)                                       # [TB, in]
    h = jnp.dot(x, w1_ref[...], preferred_element_type=jnp.float32) + b1_ref[...]
    h = _selu(h)                                                     # f32 [TB, h1]
    h = jnp.dot(h.astype(cdt), w2_ref[...],
                preferred_element_type=jnp.float32) + b2_ref[...]
    h = _selu(h)                                                     # f32 [TB, h2]
    y = jnp.dot(h.astype(cdt), w3_ref[...],
                preferred_element_type=jnp.float32) + b3_ref[...]
    o_ref[...] = _softplus(y).astype(o_ref.dtype)


def prepare_ff_params(params, compute_dtype=jnp.float32):
    """One-time layout prep (call once at init, not per forward).

    params = [(w, b), ...] with w [out, in] (PyTorch nn.Linear) and b [out].
    Returns [(w_t, b_2d), ...] with w_t [in, out] in `compute_dtype` and
    b_2d [1, out] f32.  No padding: feature dims stay at their natural sizes.
    """
    prepped = []
    for w, b in params:
        w_t = jnp.transpose(jnp.asarray(w)).astype(compute_dtype)      # [in, out]
        b_2d = jnp.asarray(b, dtype=jnp.float32).reshape(1, -1)        # [1, out]
        prepped.append((w_t, b_2d))
    return prepped


@functools.partial(jax.jit, static_argnames=("block_batch",))
def ff_forward(x, prepped_params, *, block_batch=8192):
    """Batch-tiled fused forward.  `prepped_params` from prepare_ff_params."""
    (w1, b1), (w2, b2), (w3, b3) = prepped_params
    batch, in_dim = x.shape
    out_dim = w3.shape[1]

    # Batch tile: sublane-aligned; large enough to amortize per-grid-step
    # overhead, small enough that double-buffered x/o tiles stay far under
    # every chip's scoped-VMEM default (TB=8192 -> ~1.5 MiB of tile buffers).
    tb = min(block_batch, _round_up(batch, SUBLANE))
    padded_batch = _round_up(batch, tb)
    grid = padded_batch // tb

    # Only the batch axis ever needs padding (static branch under jit).
    if padded_batch != batch:
        x_in = jnp.zeros((padded_batch, in_dim), x.dtype).at[:batch].set(x)
    else:
        x_in = x

    out = pl.pallas_call(
        ff_kernel,
        out_shape=jax.ShapeDtypeStruct((padded_batch, out_dim), jnp.float32),
        grid=(grid,),
        in_specs=[
            pl.BlockSpec((tb, in_dim), lambda i: (i, 0)),  # x: pipelined over batch
            pl.BlockSpec(w1.shape, lambda i: (0, 0)),      # weights/biases resident
            pl.BlockSpec(b1.shape, lambda i: (0, 0)),
            pl.BlockSpec(w2.shape, lambda i: (0, 0)),
            pl.BlockSpec(b2.shape, lambda i: (0, 0)),
            pl.BlockSpec(w3.shape, lambda i: (0, 0)),
            pl.BlockSpec(b3.shape, lambda i: (0, 0)),
        ],
        out_specs=pl.BlockSpec((tb, out_dim), lambda i: (i, 0)),
        compiler_params=pltpu.CompilerParams(
            dimension_semantics=("parallel",)
        ),
    )(x_in, w1, b1, w2, b2, w3, b3)

    return out[:batch] if padded_batch != batch else out


def _init_linear(key, in_dim, out_dim):
    """Deterministic lecun-normal-ish init (fan_in), zero bias (PyTorch layout)."""
    w_key, _ = jax.random.split(key)
    std = 1.0 / jnp.sqrt(jnp.float32(in_dim))
    w = jax.random.normal(w_key, (out_dim, in_dim), dtype=jnp.float32) * std
    b = jnp.zeros((out_dim,), dtype=jnp.float32)
    return w, b


def _reference_forward(x, params):
    """Pure-JAX f32 reference of the PyTorch forward (highest matmul precision)."""
    (w1, b1), (w2, b2), (w3, b3) = params
    hp = jax.lax.Precision.HIGHEST
    h = _selu(jnp.dot(x, w1.T, precision=hp) + b1)
    h = _selu(jnp.dot(h, w2.T, precision=hp) + b2)
    return _softplus(jnp.dot(h, w3.T, precision=hp) + b3)


if __name__ == "__main__":
    # FFModule(in_dim=8, neurons=[32, 32], activations=[SELU, SELU],
    #          out_activation=Softplus, out_dim=16), prepare_fn=None.
    # TODO(synk): training_step / loss_calculation are host-side training loops
    # (optimizer, dataloader) and are intentionally not kernelized.
    in_dim, hidden1, hidden2, out_dim = 8, 32, 32, 16
    batch = 16

    key = jax.random.PRNGKey(0)
    kx, k1, k2, k3 = jax.random.split(key, 4)

    x = jax.random.normal(kx, (batch, in_dim), dtype=jnp.float32)
    params = [
        _init_linear(k1, in_dim, hidden1),
        _init_linear(k2, hidden1, hidden2),
        _init_linear(k3, hidden2, out_dim),
    ]

    # One-time parameter preparation (transpose + reshape) — not per call.
    prepped = prepare_ff_params(params)

    y = ff_forward(x, prepped)
    y = jax.block_until_ready(y)

    y_ref = _reference_forward(x, params)
    assert y.shape == (batch, out_dim)
    # f32 compute end-to-end -> only summation-order-level differences.
    assert jnp.allclose(y, y_ref, atol=1e-3, rtol=1e-3), float(
        jnp.max(jnp.abs(y - y_ref))
    )

    print("KERNEL_OK")
</pallas_src>

<mosaic_0001>
module attributes {stable_mosaic.version = 11 : i64} {
  func.func @ff_kernel(%arg0: i32, %arg1: memref<16x8xf32, #tpu.memory_space<vmem>>, %arg2: memref<8x32xf32, #tpu.memory_space<vmem>>, %arg3: memref<1x32xf32, #tpu.memory_space<vmem>>, %arg4: memref<32x32xf32, #tpu.memory_space<vmem>>, %arg5: memref<1x32xf32, #tpu.memory_space<vmem>>, %arg6: memref<32x16xf32, #tpu.memory_space<vmem>>, %arg7: memref<1x16xf32, #tpu.memory_space<vmem>>, %arg8: memref<16x16xf32, #tpu.memory_space<vmem>>) attributes {dimension_semantics = [#tpu.dimension_semantics<parallel>], iteration_bounds = array<i64: 1>, scalar_prefetch = 0 : i64, scratch_operands = 0 : i64, tpu.core_type = #tpu.core_type<tc>, window_params = [{transform_indices = @transform_0, window_bounds = array<i64: 16, 8>}, {pipeline_mode = #tpu.pipeline_mode<synchronous>, transform_indices = @transform_1, window_bounds = array<i64: 8, 32>}, {pipeline_mode = #tpu.pipeline_mode<synchronous>, transform_indices = @transform_2, window_bounds = array<i64: 1, 32>}, {pipeline_mode = #tpu.pipeline_mode<synchronous>, transform_indices = @transform_3, window_bounds = array<i64: 32, 32>}, {pipeline_mode = #tpu.pipeline_mode<synchronous>, transform_indices = @transform_4, window_bounds = array<i64: 1, 32>}, {pipeline_mode = #tpu.pipeline_mode<synchronous>, transform_indices = @transform_5, window_bounds = array<i64: 32, 16>}, {pipeline_mode = #tpu.pipeline_mode<synchronous>, transform_indices = @transform_6, window_bounds = array<i64: 1, 16>}, {transform_indices = @transform_7, window_bounds = array<i64: 16, 16>}]} {
    %c0 = arith.constant 0 : index
    %c0_0 = arith.constant 0 : index
    %0 = vector.load %arg1[%c0, %c0_0] : memref<16x8xf32, #tpu.memory_space<vmem>>, vector<16x8xf32>
    %c0_1 = arith.constant 0 : index
    %c0_2 = arith.constant 0 : index
    %1 = vector.load %arg2[%c0_1, %c0_2] : memref<8x32xf32, #tpu.memory_space<vmem>>, vector<8x32xf32>
    %cst = arith.constant dense<0.000000e+00> : vector<16x32xf32>
    %2 = tpu.matmul %0, %1, %cst {dimension_numbers = #tpu.dot_dimension_numbers<[1], [0], [0], [1], [0, 0, 1, 1], [], []>} : vector<16x8xf32>, vector<8x32xf32>, vector<16x32xf32> -> vector<16x32xf32>
    %c0_3 = arith.constant 0 : index
    %c0_4 = arith.constant 0 : index
    %3 = vector.load %arg3[%c0_3, %c0_4] : memref<1x32xf32, #tpu.memory_space<vmem>>, vector<1x32xf32>
    %4 = vector.broadcast %3 : vector<1x32xf32> to vector<16x32xf32>
    %5 = arith.addf %2, %4 : vector<16x32xf32>
    %cst_5 = arith.constant 0.000000e+00 : f32
    %6 = vector.broadcast %cst_5 : f32 to vector<16x32xf32>
    %7 = arith.cmpf ogt, %5, %6 : vector<16x32xf32>
    %cst_6 = arith.constant 0.000000e+00 : f32
    %8 = vector.broadcast %cst_6 : f32 to vector<16x32xf32>
    %9 = arith.minimumf %5, %8 : vector<16x32xf32>
    %10 = math.exp %9 : vector<16x32xf32>
    %cst_7 = arith.constant 1.000000e+00 : f32
    %11 = vector.broadcast %cst_7 : f32 to vector<16x32xf32>
    %12 = arith.subf %10, %11 : vector<16x32xf32>
    %cst_8 = arith.constant 1.67326319 : f32
    %13 = vector.broadcast %cst_8 : f32 to vector<16x32xf32>
    %14 = arith.mulf %13, %12 : vector<16x32xf32>
    %15 = arith.select %7, %5, %14 : vector<16x32xi1>, vector<16x32xf32>
    %cst_9 = arith.constant 1.05070102 : f32
    %16 = vector.broadcast %cst_9 : f32 to vector<16x32xf32>
    %17 = arith.mulf %16, %15 : vector<16x32xf32>
    %c0_10 = arith.constant 0 : index
    %c0_11 = arith.constant 0 : index
    %18 = vector.load %arg4[%c0_10, %c0_11] : memref<32x32xf32, #tpu.memory_space<vmem>>, vector<32x32xf32>
    %cst_12 = arith.constant dense<0.000000e+00> : vector<16x32xf32>
    %19 = tpu.matmul %17, %18, %cst_12 {dimension_numbers = #tpu.dot_dimension_numbers<[1], [0], [0], [1], [0, 0, 1, 1], [], []>} : vector<16x32xf32>, vector<32x32xf32>, vector<16x32xf32> -> vector<16x32xf32>
    %c0_13 = arith.constant 0 : index
    %c0_14 = arith.constant 0 : index
    %20 = vector.load %arg5[%c0_13, %c0_14] : memref<1x32xf32, #tpu.memory_space<vmem>>, vector<1x32xf32>
    %21 = vector.broadcast %20 : vector<1x32xf32> to vector<16x32xf32>
    %22 = arith.addf %19, %21 : vector<16x32xf32>
    %cst_15 = arith.constant 0.000000e+00 : f32
    %23 = vector.broadcast %cst_15 : f32 to vector<16x32xf32>
    %24 = arith.cmpf ogt, %22, %23 : vector<16x32xf32>
    %cst_16 = arith.constant 0.000000e+00 : f32
    %25 = vector.broadcast %cst_16 : f32 to vector<16x32xf32>
    %26 = arith.minimumf %22, %25 : vector<16x32xf32>
    %27 = math.exp %26 : vector<16x32xf32>
    %cst_17 = arith.constant 1.000000e+00 : f32
    %28 = vector.broadcast %cst_17 : f32 to vector<16x32xf32>
    %29 = arith.subf %27, %28 : vector<16x32xf32>
    %cst_18 = arith.constant 1.67326319 : f32
    %30 = vector.broadcast %cst_18 : f32 to vector<16x32xf32>
    %31 = arith.mulf %30, %29 : vector<16x32xf32>
    %32 = arith.select %24, %22, %31 : vector<16x32xi1>, vector<16x32xf32>
    %cst_19 = arith.constant 1.05070102 : f32
    %33 = vector.broadcast %cst_19 : f32 to vector<16x32xf32>
    %34 = arith.mulf %33, %32 : vector<16x32xf32>
    %c0_20 = arith.constant 0 : index
    %c0_21 = arith.constant 0 : index
    %35 = vector.load %arg6[%c0_20, %c0_21] : memref<32x16xf32, #tpu.memory_space<vmem>>, vector<32x16xf32>
    %cst_22 = arith.constant dense<0.000000e+00> : vector<16x16xf32>
    %36 = tpu.matmul %34, %35, %cst_22 {dimension_numbers = #tpu.dot_dimension_numbers<[1], [0], [0], [1], [0, 0, 1, 1], [], []>} : vector<16x32xf32>, vector<32x16xf32>, vector<16x16xf32> -> vector<16x16xf32>
    %c0_23 = arith.constant 0 : index
    %c0_24 = arith.constant 0 : index
    %37 = vector.load %arg7[%c0_23, %c0_24] : memref<1x16xf32, #tpu.memory_space<vmem>>, vector<1x16xf32>
    %38 = vector.broadcast %37 : vector<1x16xf32> to vector<16x16xf32>
    %39 = arith.addf %36, %38 : vector<16x16xf32>
    %cst_25 = arith.constant 0.000000e+00 : f32
    %40 = vector.broadcast %cst_25 : f32 to vector<16x16xf32>
    %41 = arith.maximumf %39, %40 : vector<16x16xf32>
    %42 = math.absf %39 : vector<16x16xf32>
    %cst_26 = arith.constant 0.000000e+00 : f32
    %43 = vector.broadcast %cst_26 : f32 to vector<16x16xf32>
    %44 = arith.subf %43, %42 : vector<16x16xf32>
    %45 = math.exp %44 : vector<16x16xf32>
    %46 = math.log1p %45 : vector<16x16xf32>
    %47 = arith.addf %41, %46 : vector<16x16xf32>
    %c0_27 = arith.constant 0 : index
    %c0_28 = arith.constant 0 : index
    %48 = vector.load %arg8[%c0_27, %c0_28] : memref<16x16xf32, #tpu.memory_space<vmem>>, vector<16x16xf32>
    tpu.vector_store %arg8[%c0_27, %c0_28], %47 {strides = array<i32>} : memref<16x16xf32, #tpu.memory_space<vmem>>, vector<16x16xf32>,
    return
  }
  func.func @transform_0(%arg0: i32) -> (i32, i32) {
    %c0_i32 = arith.constant 0 : i32
    %c0_i32_0 = arith.constant 0 : i32
    return %arg0, %c0_i32 : i32, i32
  }
  func.func @transform_1(%arg0: i32) -> (i32, i32) {
    %c0_i32 = arith.constant 0 : i32
    %c0_i32_0 = arith.constant 0 : i32
    %c0_i32_1 = arith.constant 0 : i32
    return %c0_i32, %c0_i32_0 : i32, i32
  }
  func.func @transform_2(%arg0: i32) -> (i32, i32) {
    %c0_i32 = arith.constant 0 : i32
    %c0_i32_0 = arith.constant 0 : i32
    %c0_i32_1 = arith.constant 0 : i32
    return %c0_i32, %c0_i32_0 : i32, i32
  }
  func.func @transform_3(%arg0: i32) -> (i32, i32) {
    %c0_i32 = arith.constant 0 : i32
    %c0_i32_0 = arith.constant 0 : i32
    %c0_i32_1 = arith.constant 0 : i32
    return %c0_i32, %c0_i32_0 : i32, i32
  }
  func.func @transform_4(%arg0: i32) -> (i32, i32) {
    %c0_i32 = arith.constant 0 : i32
    %c0_i32_0 = arith.constant 0 : i32
    %c0_i32_1 = arith.constant 0 : i32
    return %c0_i32, %c0_i32_0 : i32, i32
  }
  func.func @transform_5(%arg0: i32) -> (i32, i32) {
    %c0_i32 = arith.constant 0 : i32
    %c0_i32_0 = arith.constant 0 : i32
    %c0_i32_1 = arith.constant 0 : i32
    return %c0_i32, %c0_i32_0 : i32, i32
  }
  func.func @transform_6(%arg0: i32) -> (i32, i32) {
    %c0_i32 = arith.constant 0 : i32
    %c0_i32_0 = arith.constant 0 : i32
    %c0_i32_1 = arith.constant 0 : i32
    return %c0_i32, %c0_i32_0 : i32, i32
  }
  func.func @transform_7(%arg0: i32) -> (i32, i32) {
    %c0_i32 = arith.constant 0 : i32
    %c0_i32_0 = arith.constant 0 : i32
    return %arg0, %c0_i32 : i32, i32
  }
}

</mosaic_0001>

<llo_original>
// kernel: ff_forward.1
$region0: #{ff_forward.1}
  #allocation0 [shape = 'u32[]', space=smem, size = 0x4, offset = 0x4, fixed_abs, tag = 'smem constant byte address 0x4 - core index']
  #allocation1 [shape = 'u32[144,128]{1,0:T(1,128)}', space=vmem, size = 0x12000, scoped, tag = 'internal scratch']
  %s0 = inlined_call_operand.vmem [shape: f32[16,8], index: 0, kind: input, shape index: {}]
  %s1 = inlined_call_operand.vmem [shape: f32[8,32], index: 1, kind: input, shape index: {}]
  %s2 = inlined_call_operand.vmem [shape: f32[1,32], index: 2, kind: input, shape index: {}]
  %s3 = inlined_call_operand.vmem [shape: f32[32,32], index: 3, kind: input, shape index: {}]
  %s4 = inlined_call_operand.vmem [shape: f32[1,32], index: 4, kind: input, shape index: {}]
  %s5 = inlined_call_operand.vmem [shape: f32[32,16], index: 5, kind: input, shape index: {}]
  %s6 = inlined_call_operand.vmem [shape: f32[1,16], index: 6, kind: input, shape index: {}]
  %s7 = inlined_call_operand.hbm [shape: f32[16,16], index: 7, kind: output, shape index: {}]
  %s8 = sld [smem:[#allocation0]]
  $region38: #{ff_forward.1} parent=0
    _
  %s10 = ssub.s32 1, %s8
  %s11 = scalar_select 0, %s10, %s8
  $region1: #{ff_forward.1} parent=0
    #allocation2 [shape = 'u8[8192]{0}', space=vmem, size = 0x2000, scoped, tag = 'output window, operand 0, single buffered']
    #allocation3 [shape = 's32[1]{0}', space=sflag, size = 0x4, scoped, tag = 'scoped memory for ff_forward.1']
    %12 = vsyncpa [#allocation3], 0
    // Predicated region
    $region2: #{ff_forward.1} parent=1 // pred_check
      _
    $region3: #{ff_forward.1} parent=1 // pred_check_branch
      %14 = sbr.rel (0) target = $region5
    $region4: #{ff_forward.1} parent=1 // pred_region
      _
    $region5: #{ff_forward.1} parent=1 // pred_fallthru
      _
    // Predicated region
    $region6: #{ff_forward.1} parent=1 // pred_check
      _
    $region7: #{ff_forward.1} parent=1 // pred_check_branch
      %16 = sbr.rel (0) target = $region9
    $region8: #{ff_forward.1} parent=1 // pred_region
      _
    $region9: #{ff_forward.1} parent=1 // pred_fallthru
      _
    // Predicated region
    $region10: #{ff_forward.1} parent=1 // pred_check
      _
    $region11: #{ff_forward.1} parent=1 // pred_check_branch
      %18 = sbr.rel (0) target = $region13
    $region12: #{ff_forward.1} parent=1 // pred_region
      _
    $region13: #{ff_forward.1} parent=1 // pred_fallthru
      _
    // Predicated region
    $region14: #{ff_forward.1} parent=1 // pred_check
      _
    $region15: #{ff_forward.1} parent=1 // pred_check_branch
      %20 = sbr.rel (0) target = $region17
    $region16: #{ff_forward.1} parent=1 // pred_region
      _
    $region17: #{ff_forward.1} parent=1 // pred_fallthru
      _
    // Predicated region
    $region18: #{ff_forward.1} parent=1 // pred_check
      _
    $region19: #{ff_forward.1} parent=1 // pred_check_branch
      %22 = sbr.rel (0) target = $region21
    $region20: #{ff_forward.1} parent=1 // pred_region
      _
    $region21: #{ff_forward.1} parent=1 // pred_fallthru
      _
    // Predicated region
    $region22: #{ff_forward.1} parent=1 // pred_check
      _
    $region23: #{ff_forward.1} parent=1 // pred_check_branch
      %24 = sbr.rel (0) target = $region25
    $region24: #{ff_forward.1} parent=1 // pred_region
      _
    $region25: #{ff_forward.1} parent=1 // pred_fallthru
      _
    // Predicated region
    $region26: #{ff_forward.1} parent=1 // pred_check
      _
    $region27: #{ff_forward.1} parent=1 // pred_check_branch
      %26 = sbr.rel (0) target = $region29
    $region28: #{ff_forward.1} parent=1 // pred_region
      _
    $region29: #{ff_forward.1} parent=1 // pred_fallthru
      _
    %v27 = vld [vmem:[%s0] sm:$0xff]
    %v28 = vld [vmem:[%s0 + $0x8] sm:$0xff]
    %v29 = vld [vmem:[%s1] sm:$0xff]
    %v30 = vld [vmem:[%s2] sm:$0x1]
    %v32 = vlaneseq
    %v33 = vshrl.u32 %v32, 7
    %v34 = vsub.s32 0, %v33
    %v35 = vrot.slane %v30, %v34
    %vm37 = vcmask 64512
    %v39 = vsel %vm37, %v27, 0
    %v42 = vsel %vm37, %v28, 0
    %44 = vmatprep.subr.mxu0 0.0
    %45 = vmatpush1.msra.mxu0 0.0
    %46 = vmatprep.subr.mxu0 0.0
    %47 = vmatpush1.msra.mxu0 0.0
    %48 = vmatprep.subr.mxu0 0.0
    %49 = vmatpush1.msra.mxu0 0.0
    %50 = vmatprep.subr.mxu0 0.0
    %51 = vmatpush1.msra.mxu0 0.0
    %52 = vmatprep.subr.mxu0 0.0
    %53 = vmatpush1.msra.mxu0 0.0
    %54 = vmatprep.subr.mxu0 0.0
    %55 = vmatpush1.msra.mxu0 0.0
    %56 = vmatprep.subr.mxu0 0.0
    %57 = vmatpush1.msra.mxu0 0.0
    %58 = vmatprep.subr.mxu0 0.0
    %59 = vmatpush1.msra.mxu0 0.0
    %60 = vmatprep.subr.mxu0 0.0
    %61 = vmatpush1.msra.mxu0 0.0
    %62 = vmatprep.subr.mxu0 0.0
    %63 = vmatpush1.msra.mxu0 0.0
    %64 = vmatprep.subr.mxu0 0.0
    %65 = vmatpush1.msra.mxu0 0.0
    %66 = vmatprep.subr.mxu0 0.0
    %67 = vmatpush1.msra.mxu0 0.0
    %68 = vmatprep.subr.mxu0 0.0
    %69 = vmatpush1.msra.mxu0 0.0
    %70 = vmatprep.subr.mxu0 0.0
    %71 = vmatpush1.msra.mxu0 0.0
    %72 = vmatprep.subr.mxu0 0.0
    %73 = vmatpush1.msra.mxu0 0.0
    %74 = vmatprep.subr.mxu0 0.0
    %75 = vmatpush1.msra.mxu0 %v29
    %76 = vmatprep.subr.mxu0 0.0
    %77 = vmatpush2.msra.mxu0 0.0
    %78 = vmatprep.subr.mxu0 0.0
    %79 = vmatpush2.msra.mxu0 0.0
    %80 = vmatprep.subr.mxu0 0.0
    %81 = vmatpush2.msra.mxu0 0.0
    %82 = vmatprep.subr.mxu0 0.0
    %83 = vmatpush2.msra.mxu0 0.0
    %84 = vmatprep.subr.mxu0 0.0
    %85 = vmatpush2.msra.mxu0 0.0
    %86 = vmatprep.subr.mxu0 0.0
    %87 = vmatpush2.msra.mxu0 0.0
    %88 = vmatprep.subr.mxu0 0.0
    %89 = vmatpush2.msra.mxu0 0.0
    %90 = vmatprep.subr.mxu0 0.0
    %91 = vmatpush2.msra.mxu0 0.0
    %92 = vmatprep.subr.mxu0 0.0
    %93 = vmatpush2.msra.mxu0 0.0
    %94 = vmatprep.subr.mxu0 0.0
    %95 = vmatpush2.msra.mxu0 0.0
    %96 = vmatprep.subr.mxu0 0.0
    %97 = vmatpush2.msra.mxu0 0.0
    %98 = vmatprep.subr.mxu0 0.0
    %99 = vmatpush2.msra.mxu0 0.0
    %100 = vmatprep.subr.mxu0 0.0
    %101 = vmatpush2.msra.mxu0 0.0
    %102 = vmatprep.subr.mxu0 0.0
    %103 = vmatpush2.msra.mxu0 0.0
    %104 = vmatprep.subr.mxu0 0.0
    %105 = vmatpush2.msra.mxu0 0.0
    %106 = vmatprep.subr.mxu0 0.0
    %107 = vmatpush2.msra.mxu0 0.0
    %108 = vmatprep.mubr.f32.mxu0 0.0
    %109 = vmatmul.mubr.f32.gmra.mxu0 %v39
    %v110 = vpop.f32.mrf.mxu0
    %v111 = vadd.f32 %v35, %v110
    %v112 = vpop.f32.mrf.mxu0
    %113 = vmatprep.mubr.f32.mxu0 0.0
    %114 = vmatmul.mubr.f32.gmra.mxu0 %v42
    %v115 = vpop.f32.mrf.mxu0
    %v116 = vadd.f32 %v35, %v115
    %v117 = vpop.f32.mrf.mxu0
    %118 = vdwg.mxu0
    %vm119 = vcmp.gt.f32.partialorder %v111, 0.0
    %vm120 = vcmp.gt.f32.partialorder %v116, 0.0
    %v121 = vmin.f32 %v111, 0.0
    %v122 = vmin.f32 %v116, 0.0
    %v123 = vmul.f32 %v121, 1.442695
    %v124 = vpow.pop %v123
    %v125 = vmul.f32 %v122, 1.442695
    %v126 = vpow.pop %v125
    %v127 = vsub.f32 %v124, 1.0
    %v128 = vsub.f32 %v126, 1.0
    %v129 = vmul.f32 %v127, 1.6732632
    %v130 = vmul.f32 %v128, 1.6732632
    %v131 = vsel %vm119, %v111, %v129
    %v132 = vsel %vm120, %v116, %v130
    %v133 = vmul.f32 %v131, 1.050701
    %v134 = vmul.f32 %v132, 1.050701
    %v135 = vld [vmem:[%s3] sm:$0xff]
    %v136 = vld [vmem:[%s3 + $0x8] sm:$0xff]
    %v137 = vld [vmem:[%s3 + $0x10] sm:$0xff]
    %v138 = vld [vmem:[%s3 + $0x18] sm:$0xff]
    %v139 = vld [vmem:[%s4] sm:$0x1]
    %v141 = vlaneseq
    %v142 = vshrl.u32 %v141, 7
    %v143 = vsub.s32 0, %v142
    %v144 = vrot.slane %v139, %v143
    %vm146 = vcmask 261120
    %v148 = vsel %vm146, %v133, 0
    %v151 = vsel %vm146, %v134, 0
    %153 = vmatprep.subr.mxu0 0.0
    %154 = vmatpush1.msra.mxu0 0.0
    %155 = vmatprep.subr.mxu0 0.0
    %156 = vmatpush1.msra.mxu0 0.0
    %157 = vmatprep.subr.mxu0 0.0
    %158 = vmatpush1.msra.mxu0 0.0
    %159 = vmatprep.subr.mxu0 0.0
    %160 = vmatpush1.msra.mxu0 0.0
    %161 = vmatprep.subr.mxu0 0.0
    %162 = vmatpush1.msra.mxu0 0.0
    %163 = vmatprep.subr.mxu0 0.0
    %164 = vmatpush1.msra.mxu0 0.0
    %165 = vmatprep.subr.mxu0 0.0
    %166 = vmatpush1.msra.mxu0 0.0
    %167 = vmatprep.subr.mxu0 0.0
    %168 = vmatpush1.msra.mxu0 0.0
    %169 = vmatprep.subr.mxu0 0.0
    %170 = vmatpush1.msra.mxu0 0.0
    %171 = vmatprep.subr.mxu0 0.0
    %172 = vmatpush1.msra.mxu0 0.0
    %173 = vmatprep.subr.mxu0 0.0
    %174 = vmatpush1.msra.mxu0 0.0
    %175 = vmatprep.subr.mxu0 0.0
    %176 = vmatpush1.msra.mxu0 0.0
    %177 = vmatprep.subr.mxu0 0.0
    %178 = vmatpush1.msra.mxu0 %v138
    %179 = vmatprep.subr.mxu0 0.0
    %180 = vmatpush1.msra.mxu0 %v137
    %181 = vmatprep.subr.mxu0 0.0
    %182 = vmatpush1.msra.mxu0 %v136
    %183 = vmatprep.subr.mxu0 0.0
    %184 = vmatpush1.msra.mxu0 %v135
    %185 = vmatprep.subr.mxu0 0.0
    %186 = vmatpush2.msra.mxu0 0.0
    %187 = vmatprep.subr.mxu0 0.0
    %188 = vmatpush2.msra.mxu0 0.0
    %189 = vmatprep.subr.mxu0 0.0
    %190 = vmatpush2.msra.mxu0 0.0
    %191 = vmatprep.subr.mxu0 0.0
    %192 = vmatpush2.msra.mxu0 0.0
    %193 = vmatprep.subr.mxu0 0.0
    %194 = vmatpush2.msra.mxu0 0.0
    %195 = vmatprep.subr.mxu0 0.0
    %196 = vmatpush2.msra.mxu0 0.0
    %197 = vmatprep.subr.mxu0 0.0
    %198 = vmatpush2.msra.mxu0 0.0
    %199 = vmatprep.subr.mxu0 0.0
    %200 = vmatpush2.msra.mxu0 0.0
    %201 = vmatprep.subr.mxu0 0.0
    %202 = vmatpush2.msra.mxu0 0.0
    %203 = vmatprep.subr.mxu0 0.0
    %204 = vmatpush2.msra.mxu0 0.0
    %205 = vmatprep.subr.mxu0 0.0
    %206 = vmatpush2.msra.mxu0 0.0
    %207 = vmatprep.subr.mxu0 0.0
    %208 = vmatpush2.msra.mxu0 0.0
    %209 = vmatprep.subr.mxu0 0.0
    %210 = vmatpush2.msra.mxu0 0.0
    %211 = vmatprep.subr.mxu0 0.0
    %212 = vmatpush2.msra.mxu0 0.0
    %213 = vmatprep.subr.mxu0 0.0
    %214 = vmatpush2.msra.mxu0 0.0
    %215 = vmatprep.subr.mxu0 0.0
    %216 = vmatpush2.msra.mxu0 0.0
    %217 = vmatprep.mubr.f32.mxu0 0.0
    %218 = vmatmul.mubr.f32.gmra.mxu0 %v148
    %v219 = vpop.f32.mrf.mxu0
    %v220 = vadd.f32 %v144, %v219
    %v221 = vpop.f32.mrf.mxu0
    %222 = vmatprep.mubr.f32.mxu0 0.0
    %223 = vmatmul.mubr.f32.gmra.mxu0 %v151
    %v224 = vpop.f32.mrf.mxu0
    %v225 = vadd.f32 %v144, %v224
    %v226 = vpop.f32.mrf.mxu0
    %227 = vdwg.mxu0
    %vm228 = vcmp.gt.f32.partialorder %v220, 0.0
    %vm229 = vcmp.gt.f32.partialorder %v225, 0.0
    %v230 = vmin.f32 %v220, 0.0
    %v231 = vmin.f32 %v225, 0.0
    %v232 = vmul.f32 %v230, 1.442695
    %v233 = vpow.pop %v232
    %v234 = vmul.f32 %v231, 1.442695
    %v235 = vpow.pop %v234
    %v236 = vsub.f32 %v233, 1.0
    %v237 = vsub.f32 %v235, 1.0
    %v238 = vmul.f32 %v236, 1.6732632
    %v239 = vmul.f32 %v237, 1.6732632
    %v240 = vsel %vm228, %v220, %v238
    %v241 = vsel %vm229, %v225, %v239
    %v242 = vmul.f32 %v240, 1.050701
    %v243 = vmul.f32 %v241, 1.050701
    %v244 = vld [vmem:[%s5] sm:$0xff]
    %v245 = vld [vmem:[%s5 + $0x8] sm:$0xff]
    %v246 = vld [vmem:[%s5 + $0x10] sm:$0xff]
    %v247 = vld [vmem:[%s5 + $0x18] sm:$0xff]
    %v248 = vld [vmem:[%s6] sm:$0x1]
    %v250 = vlaneseq
    %v251 = vshrl.u32 %v250, 7
    %v252 = vsub.s32 0, %v251
    %v253 = vrot.slane %v248, %v252
    %v256 = vsel %vm146, %v242, 0
    %v259 = vsel %vm146, %v243, 0
    %261 = vmatprep.subr.mxu0 0.0
    %262 = vmatpush1.msra.mxu0 0.0
    %263 = vmatprep.subr.mxu0 0.0
    %264 = vmatpush1.msra.mxu0 0.0
    %265 = vmatprep.subr.mxu0 0.0
    %266 = vmatpush1.msra.mxu0 0.0
    %267 = vmatprep.subr.mxu0 0.0
    %268 = vmatpush1.msra.mxu0 0.0
    %269 = vmatprep.subr.mxu0 0.0
    %270 = vmatpush1.msra.mxu0 0.0
    %271 = vmatprep.subr.mxu0 0.0
    %272 = vmatpush1.msra.mxu0 0.0
    %273 = vmatprep.subr.mxu0 0.0
    %274 = vmatpush1.msra.mxu0 0.0
    %275 = vmatprep.subr.mxu0 0.0
    %276 = vmatpush1.msra.mxu0 0.0
    %277 = vmatprep.subr.mxu0 0.0
    %278 = vmatpush1.msra.mxu0 0.0
    %279 = vmatprep.subr.mxu0 0.0
    %280 = vmatpush1.msra.mxu0 0.0
    %281 = vmatprep.subr.mxu0 0.0
    %282 = vmatpush1.msra.mxu0 0.0
    %283 = vmatprep.subr.mxu0 0.0
    %284 = vmatpush1.msra.mxu0 0.0
    %285 = vmatprep.subr.mxu0 0.0
    %286 = vmatpush1.msra.mxu0 %v247
    %287 = vmatprep.subr.mxu0 0.0
    %288 = vmatpush1.msra.mxu0 %v246
    %289 = vmatprep.subr.mxu0 0.0
    %290 = vmatpush1.msra.mxu0 %v245
    %291 = vmatprep.subr.mxu0 0.0
    %292 = vmatpush1.msra.mxu0 %v244
    %293 = vmatprep.subr.mxu0 0.0
    %294 = vmatpush2.msra.mxu0 0.0
    %295 = vmatprep.subr.mxu0 0.0
    %296 = vmatpush2.msra.mxu0 0.0
    %297 = vmatprep.subr.mxu0 0.0
    %298 = vmatpush2.msra.mxu0 0.0
    %299 = vmatprep.subr.mxu0 0.0
    %300 = vmatpush2.msra.mxu0 0.0
    %301 = vmatprep.subr.mxu0 0.0
    %302 = vmatpush2.msra.mxu0 0.0
    %303 = vmatprep.subr.mxu0 0.0
    %304 = vmatpush2.msra.mxu0 0.0
    %305 = vmatprep.subr.mxu0 0.0
    %306 = vmatpush2.msra.mxu0 0.0
    %307 = vmatprep.subr.mxu0 0.0
    %308 = vmatpush2.msra.mxu0 0.0
    %309 = vmatprep.subr.mxu0 0.0
    %310 = vmatpush2.msra.mxu0 0.0
    %311 = vmatprep.subr.mxu0 0.0
    %312 = vmatpush2.msra.mxu0 0.0
    %313 = vmatprep.subr.mxu0 0.0
    %314 = vmatpush2.msra.mxu0 0.0
    %315 = vmatprep.subr.mxu0 0.0
    %316 = vmatpush2.msra.mxu0 0.0
    %317 = vmatprep.subr.mxu0 0.0
    %318 = vmatpush2.msra.mxu0 0.0
    %319 = vmatprep.subr.mxu0 0.0
    %320 = vmatpush2.msra.mxu0 0.0
    %321 = vmatprep.subr.mxu0 0.0
    %322 = vmatpush2.msra.mxu0 0.0
    %323 = vmatprep.subr.mxu0 0.0
    %324 = vmatpush2.msra.mxu0 0.0
    %325 = vmatprep.mubr.f32.mxu0 0.0
    %326 = vmatmul.mubr.f32.gmra.mxu0 %v256
    %v327 = vpop.f32.mrf.mxu0
    %v328 = vadd.f32 %v253, %v327
    %v329 = vpop.f32.mrf.mxu0
    %330 = vmatprep.mubr.f32.mxu0 0.0
    %331 = vmatmul.mubr.f32.gmra.mxu0 %v259
    %v332 = vpop.f32.mrf.mxu0
    %v333 = vadd.f32 %v253, %v332
    %v334 = vpop.f32.mrf.mxu0
    %335 = vdwg.mxu0
    %v336 = vmax.f32 %v328, 0.0
    %v337 = vmax.f32 %v333, 0.0
    %v338 = vand.u32 2147483647, %v328
    %v339 = vand.u32 2147483647, %v333
    %v340 = vsub.f32 0.0, %v338
    %v341 = vsub.f32 0.0, %v339
    %v342 = vmul.f32 %v340, 1.442695
    %v343 = vpow.pop %v342
    %v344 = vmul.f32 %v341, 1.442695
    %v345 = vpow.pop %v344
    %v346 = vadd.f32 %v343, 1.0
    %v347 = vlog2.pop %v346
    %v348 = vmul.f32 %v347, 0.6931472
    %v349 = vmul.f32 -0.5, %v343
    %v350 = vadd.f32 %v349, 1.0
    %v351 = vmul.f32 %v350, %v343
    %v352 = vand.u32 2147483647, %v343
    %vm353 = vcmp.lt.f32.partialorder %v352, 0.0004427343
    %v354 = vsel %vm353, %v351, %v348
    %v355 = vadd.f32 %v345, 1.0
    %v356 = vlog2.pop %v355
    %v357 = vmul.f32 %v356, 0.6931472
    %v358 = vmul.f32 -0.5, %v345
    %v359 = vadd.f32 %v358, 1.0
    %v360 = vmul.f32 %v359, %v345
    %v361 = vand.u32 2147483647, %v345
    %vm362 = vcmp.lt.f32.partialorder %v361, 0.0004427343
    %v363 = vsel %vm362, %v360, %v357
    %v364 = vadd.f32 %v336, %v354
    %v365 = vadd.f32 %v337, %v363
    %vm366 = vcmask 130048
    %367 = vst.msk [vmem:[#allocation2] sm:$0xff] %vm366, %v364
    %368 = vst.msk [vmem:[#allocation2 + $0x8] sm:$0xff] %vm366, %v365
    // Predicated region
    $region30: #{ff_forward.1} parent=1 // pred_check
      _
    $region31: #{ff_forward.1} parent=1 // pred_check_branch
      %370 = sbr.rel (0) target = $region33
    $region32: #{ff_forward.1} parent=1 // pred_region
      %s372 = ssub.s32 256, 256
      %373 = vsyncadd [#allocation3], %s372
      %s374 = sshll.u32 [#allocation2], 4
      %s375 = int_to_ptr.vmem [resolvable:$true] %s374
      %380 = dma.vmem_to_hbm [thread:$0]  %s375, 256, %s7, [#allocation3], 128, 128, 8
    $region33: #{ff_forward.1} parent=1 // pred_fallthru
      _
    // Predicated region
    $region34: #{ff_forward.1} parent=1 // pred_check
      _
    $region35: #{ff_forward.1} parent=1 // pred_check_branch
      %382 = sbr.rel (0) target = $region37
    $region36: #{ff_forward.1} parent=1 // pred_region
      %383 = dma.done [#allocation3], 256
    $region37: #{ff_forward.1} parent=1 // pred_fallthru
      _
    %384 = vsyncpa [#allocation3], 1

</llo_original>
